<compile_context>
chip_gen: v7x
topology: tpu7x:2x2x1
jax: 0.10.0
libtpu: 0.0.40
codegen_flags: <defaults>
</compile_context>

<pallas_src>
import functools

import jax
import jax.numpy as jnp
from jax.experimental import pallas as pl
from jax.experimental.pallas import tpu as pltpu

_LANE = 128


def _focal_loss_kernel(p_ref, t_ref, out_ref, *, gamma, lane_chunks, r_tile,
                       l_tile, rows, cols):
    i = pl.program_id(0)
    j = pl.program_id(1)

    # Output block is resident across the (arbitrary) lane axis: zero it once.
    @pl.when(j == 0)
    def _():
        out_ref[...] = jnp.zeros_like(out_ref)

    eps = jnp.float32(1e-07)

    need_row_mask = (rows % r_tile) != 0
    need_col_mask = (cols % l_tile) != 0

    row_mask = None
    if need_row_mask:
        row_ids = i * r_tile + jax.lax.broadcasted_iota(
            jnp.int32, (r_tile, _LANE), 0)
        row_mask = row_ids < rows

    g_int = int(gamma)
    int_gamma = float(gamma) == float(g_int) and g_int >= 0

    acc = jnp.zeros((r_tile, _LANE), jnp.float32)
    # Per-128-lane chunk: static ref slices -> bounded (r_tile, 128) temporaries.
    for g in range(lane_chunks):
        lo = g * _LANE
        p = p_ref[:, lo:lo + _LANE].astype(jnp.float32)
        t = t_ref[:, lo:lo + _LANE].astype(jnp.float32)

        mask = row_mask
        if need_col_mask:
            col_ids = (j * l_tile + lo) + jax.lax.broadcasted_iota(
                jnp.int32, (r_tile, _LANE), 1)
            col_mask = col_ids < cols
            mask = col_mask if mask is None else (mask & col_mask)
        if mask is not None:
            # Safe fill for out-of-bounds elements: contribution becomes 0.
            p = jnp.where(mask, p, 1.0)
            t = jnp.where(mask, t, 0.0)

        ce = -jnp.log(p + eps) * t
        one_minus_p = 1.0 - p
        if int_gamma:
            # Integer gamma: repeated multiply on the VPU (no EUP exp/log).
            if g_int == 0:
                mod = jnp.ones_like(one_minus_p)
            else:
                mod = one_minus_p
                for _ in range(g_int - 1):
                    mod = mod * one_minus_p
        else:
            # Clamp: p can round slightly above 1 and a negative base with a
            # fractional exponent would produce NaN.
            mod = jnp.power(jnp.maximum(one_minus_p, 0.0), jnp.float32(gamma))

        acc = acc + mod * ce

    out_ref[...] += acc


def _round_up(x, m):
    return ((x + m - 1) // m) * m


def _sublane(dtype):
    # Minimum second-minor block multiple for a dtype (f32: 8, bf16: 16, i8: 32).
    return max(8, 32 // max(1, jnp.dtype(dtype).itemsize))


@functools.partial(jax.jit, static_argnames=("gamma",))
def focal_loss(preds, labels, weight, gamma=2):
    """preds/labels: (N, C, *spatial); weight: per-class, broadcastable to (C,).

    Returns the scalar focal loss (float32), matching the PyTorch forward.
    Inputs may be f32 / bf16 (labels also int); accumulation is f32.
    """
    N, C = preds.shape[0], preds.shape[1]
    HW = 1
    for d in preds.shape[2:]:
        HW *= int(d)
    R = N * C

    p2 = preds.reshape(R, HW)
    t2 = labels.reshape(R, HW)

    # ---- tile sizing: lane-dense, sublane-dense, ~8 MiB (f32) per input block.
    target_elems = 2 * 1024 * 1024
    r_align = max(_sublane(p2.dtype), _sublane(t2.dtype))
    r_cap = _round_up(R, r_align)
    hw128 = _round_up(HW, _LANE)

    if hw128 <= 2048:
        l_tile = hw128
    else:
        # Grow the lane tile past 2048 only when R is too small to reach the
        # target block size (keeps the unrolled chunk count bounded <= 64).
        l_needed = _round_up(-(-target_elems // r_cap), _LANE)
        l_tile = min(hw128, min(8192, max(2048, l_needed)))

    r_tile = max(r_align,
                 min(r_cap, (target_elems // l_tile) // r_align * r_align))
    # v7x has 2 TensorCores: keep >= 2 steps on the "parallel" row axis when possible.
    if r_cap >= 2 * r_align:
        r_tile = min(r_tile, max(r_align, (r_cap // 2) // r_align * r_align))

    r_pad = _round_up(R, r_tile)
    hw_pad = _round_up(HW, l_tile)
    grid = (r_pad // r_tile, hw_pad // l_tile)
    lane_chunks = l_tile // _LANE

    kernel = functools.partial(
        _focal_loss_kernel, gamma=float(gamma), lane_chunks=lane_chunks,
        r_tile=r_tile, l_tile=l_tile, rows=R, cols=HW)

    cost = pl.CostEstimate(
        flops=8 * R * HW,
        transcendentals=R * HW,
        bytes_accessed=(p2.size * p2.dtype.itemsize
                        + t2.size * t2.dtype.itemsize
                        + r_pad * _LANE * 4),
    )

    partials = pl.pallas_call(
        kernel,
        out_shape=jax.ShapeDtypeStruct((r_pad, _LANE), jnp.float32),
        grid_spec=pltpu.PrefetchScalarGridSpec(
            num_scalar_prefetch=0,
            grid=grid,
            in_specs=[
                pl.BlockSpec((r_tile, l_tile), lambda i, j: (i, j)),
                pl.BlockSpec((r_tile, l_tile), lambda i, j: (i, j)),
            ],
            out_specs=pl.BlockSpec((r_tile, _LANE), lambda i, j: (i, 0)),
        ),
        compiler_params=pltpu.CompilerParams(
            dimension_semantics=("parallel", "arbitrary"),
            vmem_limit_bytes=44 * 1024 * 1024,
        ),
        cost_estimate=cost,
    )(p2, t2)

    # Tiny JAX epilogue: fold the 128 partial lanes, apply the per-class weight
    # (row index = n*C + c -> weight[c]), and take the mean over (N, HW).
    w_c = jnp.broadcast_to(jnp.asarray(weight, jnp.float32).reshape(-1), (C,))
    w_rows = jnp.tile(w_c, N)                        # (R,)
    row_sums = jnp.sum(partials[:R], axis=1)         # (R,)
    return jnp.sum(row_sums * w_rows) / jnp.float32(N * HW)


def _reference_focal_loss(preds, labels, weight, gamma=2):
    """Pure-JAX reference mirroring the PyTorch module line by line."""
    eps = 1e-07
    N, C = preds.shape[0], preds.shape[1]
    y_pred = preds.reshape(N, C, -1).astype(jnp.float32)
    target = labels.reshape(y_pred.shape).astype(jnp.float32)
    ce = -1.0 * jnp.log(y_pred + eps) * target
    floss = jnp.power(1.0 - y_pred, gamma) * ce
    floss = floss * jnp.asarray(weight, jnp.float32)   # (N,C,HW) * (C,1)
    floss = jnp.sum(floss, axis=1)
    return jnp.mean(floss)


if __name__ == "__main__":
    key = jax.random.PRNGKey(0)
    k1, k2 = jax.random.split(key)

    N, C, H, W = 2, 4, 16, 16

    # "preds" are softmax outputs over the class dim (kept f32 here).
    logits = jax.random.normal(k1, (N, C, H, W), dtype=jnp.float32)
    preds = jax.nn.softmax(logits, axis=1)

    # One-hot targets stored as bf16: exact for 0/1 values and halves the
    # label HBM traffic of this memory-bound kernel.
    cls = jax.random.randint(k2, (N, H, W), 0, C)
    labels = jax.nn.one_hot(cls, C, axis=1, dtype=jnp.bfloat16)  # (N, C, H, W)

    # Deterministic per-class weights, shape (C, 1).
    weight = (jnp.arange(1, C + 1, dtype=jnp.float32) / C).reshape(C, 1)

    loss = focal_loss(preds, labels, weight, gamma=2)
    loss = jax.block_until_ready(loss)

    ref = _reference_focal_loss(preds, labels, weight, gamma=2)
    assert jnp.allclose(loss, ref, rtol=1e-5, atol=1e-6), (loss, ref)

    print("KERNEL_OK")
</pallas_src>

<mosaic_0001>
module attributes {stable_mosaic.version = 11 : i64} {
  func.func @_focal_loss_kernel(%arg0: i32, %arg1: i32, %arg2: memref<16x256xf32, #tpu.memory_space<vmem>>, %arg3: memref<16x256xbf16, #tpu.memory_space<vmem>>, %arg4: memref<16x128xf32, #tpu.memory_space<vmem>>) attributes {dimension_semantics = [#tpu.dimension_semantics<parallel>, #tpu.dimension_semantics<arbitrary>], iteration_bounds = array<i64: 1, 1>, scalar_prefetch = 0 : i64, scratch_operands = 0 : i64, tpu.core_type = #tpu.core_type<tc>, window_params = [{transform_indices = @transform_0, window_bounds = array<i64: 16, 256>}, {transform_indices = @transform_1, window_bounds = array<i64: 16, 256>}, {transform_indices = @transform_2, window_bounds = array<i64: 16, 128>}]} {
    %c0_i32 = arith.constant 0 : i32
    %0 = arith.cmpi eq, %arg1, %c0_i32 : i32
    %1 = arith.extui %0 : i1 to i32
    %c0_i32_0 = arith.constant 0 : i32
    %2 = arith.cmpi ne, %1, %c0_i32_0 : i32
    scf.if %2 {
      %cst_21 = arith.constant 0.000000e+00 : f32
      %49 = vector.broadcast %cst_21 : f32 to vector<16x128xf32>
      %c0_22 = arith.constant 0 : index
      %c0_23 = arith.constant 0 : index
      %50 = vector.load %arg4[%c0_22, %c0_23] : memref<16x128xf32, #tpu.memory_space<vmem>>, vector<16x128xf32>
      tpu.vector_store %arg4[%c0_22, %c0_23], %49 {strides = array<i32>} : memref<16x128xf32, #tpu.memory_space<vmem>>, vector<16x128xf32>,
    } else {
    }
    %c16_i32 = arith.constant 16 : i32
    %3 = arith.muli %arg0, %c16_i32 : i32
    %4 = tpu.iota {dimensions = array<i32: 0>} : vector<16x128xi32>
    %5 = vector.broadcast %3 : i32 to vector<16x128xi32>
    %6 = arith.addi %5, %4 : vector<16x128xi32>
    %c8_i32 = arith.constant 8 : i32
    %7 = vector.broadcast %c8_i32 : i32 to vector<16x128xi32>
    %8 = arith.cmpi slt, %6, %7 : vector<16x128xi32>
    %cst = arith.constant 0.000000e+00 : f32
    %9 = vector.broadcast %cst : f32 to vector<16x128xf32>
    %c0 = arith.constant 0 : index
    %c0_1 = arith.constant 0 : index
    %10 = vector.load %arg2[%c0, %c0_1] : memref<16x256xf32, #tpu.memory_space<vmem>>, vector<16x128xf32>
    %c0_2 = arith.constant 0 : index
    %c0_3 = arith.constant 0 : index
    %11 = vector.load %arg3[%c0_2, %c0_3] : memref<16x256xbf16, #tpu.memory_space<vmem>>, vector<16x128xbf16>
    %12 = arith.extf %11 : vector<16x128xbf16> to vector<16x128xf32>
    %cst_4 = arith.constant 1.000000e+00 : f32
    %13 = vector.broadcast %cst_4 : f32 to vector<16x128xf32>
    %14 = arith.select %8, %10, %13 : vector<16x128xi1>, vector<16x128xf32>
    %cst_5 = arith.constant 0.000000e+00 : f32
    %15 = vector.broadcast %cst_5 : f32 to vector<16x128xf32>
    %16 = arith.select %8, %12, %15 : vector<16x128xi1>, vector<16x128xf32>
    %cst_6 = arith.constant 1.000000e-07 : f32
    %17 = vector.broadcast %cst_6 : f32 to vector<16x128xf32>
    %18 = arith.addf %14, %17 : vector<16x128xf32>
    %19 = math.log %18 : vector<16x128xf32>
    %cst_7 = arith.constant 0.000000e+00 : f32
    %20 = vector.broadcast %cst_7 : f32 to vector<16x128xf32>
    %21 = arith.subf %20, %19 : vector<16x128xf32>
    %22 = arith.mulf %21, %16 : vector<16x128xf32>
    %cst_8 = arith.constant 1.000000e+00 : f32
    %23 = vector.broadcast %cst_8 : f32 to vector<16x128xf32>
    %24 = arith.subf %23, %14 : vector<16x128xf32>
    %25 = arith.mulf %24, %24 : vector<16x128xf32>
    %26 = arith.mulf %25, %22 : vector<16x128xf32>
    %27 = arith.addf %9, %26 : vector<16x128xf32>
    %c0_9 = arith.constant 0 : index
    %c128 = arith.constant 128 : index
    %28 = vector.load %arg2[%c0_9, %c128] : memref<16x256xf32, #tpu.memory_space<vmem>>, vector<16x128xf32>
    %c0_10 = arith.constant 0 : index
    %c128_11 = arith.constant 128 : index
    %29 = vector.load %arg3[%c0_10, %c128_11] : memref<16x256xbf16, #tpu.memory_space<vmem>>, vector<16x128xbf16>
    %30 = arith.extf %29 : vector<16x128xbf16> to vector<16x128xf32>
    %cst_12 = arith.constant 1.000000e+00 : f32
    %31 = vector.broadcast %cst_12 : f32 to vector<16x128xf32>
    %32 = arith.select %8, %28, %31 : vector<16x128xi1>, vector<16x128xf32>
    %cst_13 = arith.constant 0.000000e+00 : f32
    %33 = vector.broadcast %cst_13 : f32 to vector<16x128xf32>
    %34 = arith.select %8, %30, %33 : vector<16x128xi1>, vector<16x128xf32>
    %cst_14 = arith.constant 1.000000e-07 : f32
    %35 = vector.broadcast %cst_14 : f32 to vector<16x128xf32>
    %36 = arith.addf %32, %35 : vector<16x128xf32>
    %37 = math.log %36 : vector<16x128xf32>
    %cst_15 = arith.constant 0.000000e+00 : f32
    %38 = vector.broadcast %cst_15 : f32 to vector<16x128xf32>
    %39 = arith.subf %38, %37 : vector<16x128xf32>
    %40 = arith.mulf %39, %34 : vector<16x128xf32>
    %cst_16 = arith.constant 1.000000e+00 : f32
    %41 = vector.broadcast %cst_16 : f32 to vector<16x128xf32>
    %42 = arith.subf %41, %32 : vector<16x128xf32>
    %43 = arith.mulf %42, %42 : vector<16x128xf32>
    %44 = arith.mulf %43, %40 : vector<16x128xf32>
    %45 = arith.addf %27, %44 : vector<16x128xf32>
    %c0_17 = arith.constant 0 : index
    %c0_18 = arith.constant 0 : index
    %46 = vector.load %arg4[%c0_17, %c0_18] : memref<16x128xf32, #tpu.memory_space<vmem>>, vector<16x128xf32>
    %47 = arith.addf %46, %45 : vector<16x128xf32>
    %c0_19 = arith.constant 0 : index
    %c0_20 = arith.constant 0 : index
    %48 = vector.load %arg4[%c0_19, %c0_20] : memref<16x128xf32, #tpu.memory_space<vmem>>, vector<16x128xf32>
    tpu.vector_store %arg4[%c0_19, %c0_20], %47 {strides = array<i32>} : memref<16x128xf32, #tpu.memory_space<vmem>>, vector<16x128xf32>,
    return
  }
  func.func @transform_0(%arg0: i32, %arg1: i32) -> (i32, i32) {
    %c0_i32 = arith.constant 0 : i32
    return %arg0, %arg1 : i32, i32
  }
  func.func @transform_1(%arg0: i32, %arg1: i32) -> (i32, i32) {
    %c0_i32 = arith.constant 0 : i32
    return %arg0, %arg1 : i32, i32
  }
  func.func @transform_2(%arg0: i32, %arg1: i32) -> (i32, i32) {
    %c0_i32 = arith.constant 0 : i32
    %c0_i32_0 = arith.constant 0 : i32
    return %arg0, %c0_i32 : i32, i32
  }
}

</mosaic_0001>

<llo_original>
// kernel: focal_loss.1
$region0: #{focal_loss.1}
  #allocation0 [shape = 'u32[]', space=smem, size = 0x4, offset = 0x4, fixed_abs, tag = 'smem constant byte address 0x4 - core index']
  #allocation1 [shape = 'u32[144,128]{1,0:T(1,128)}', space=vmem, size = 0x12000, scoped, tag = 'internal scratch']
  %s0 = inlined_call_operand.vmem [shape: f32[8,256], index: 0, kind: input, shape index: {}]
  %s1 = inlined_call_operand.vmem [shape: bf16[8,256], index: 1, kind: input, shape index: {}]
  %s2 = inlined_call_operand.vmem [shape: f32[16,128], index: 2, kind: output, shape index: {}]
  %s3 = sld [smem:[#allocation0]]
  $region22: #{focal_loss.1} parent=0
    _
  %s5 = ssub.s32 1, %s3
  %s6 = scalar_select 0, %s5, %s3
  // Predicated region
  $region2: #{focal_loss.1} parent=0 // pred_check
    _
  $region3: #{focal_loss.1} parent=0 // pred_check_branch
    %8 = sbr.rel (0) target = $region5
  $region4: #{focal_loss.1} parent=0 // pred_region
    _
  $region5: #{focal_loss.1} parent=0 // pred_fallthru
    _
  // Predicated region
  $region6: #{focal_loss.1} parent=0 // pred_check
    _
  $region7: #{focal_loss.1} parent=0 // pred_check_branch
    %10 = sbr.rel (0) target = $region9
  $region8: #{focal_loss.1} parent=0 // pred_region
    _
  $region9: #{focal_loss.1} parent=0 // pred_fallthru
    _
  %p11 = scmp.eq.s32.totalorder 0, 0
  // Predicated region
  $region10: #{focal_loss.1} parent=0 // pred_check
    %p12 = pneg %p11
  $region11: #{focal_loss.1} parent=0 // pred_check_branch
    %14 = sbr.rel (%p12) target = $region13
  $region12: #{focal_loss.1} parent=0 // pred_region
    %15 = vst [vmem:[%s2] sm:$0xff] 0.0
    %16 = vst [vmem:[%s2 + $0x8] sm:$0xff] 0.0
  $region13: #{focal_loss.1} parent=0 // pred_fallthru
    _
  %s17 = smul.u32 0, 16
  %v18 = vlaneseq
  %v19 = vshrl.u32 %v18, 7
  %v20 = vadd.s32 %v19, 8
  %v21 = vstv %s17
  %v22 = vadd.s32 %v21, %v19
  %v23 = vadd.s32 %v21, %v20
  %vm24 = vcmp.lt.s32.totalorder %v22, 8
  %vm25 = vcmp.lt.s32.totalorder %v23, 8
  %v26 = vld [vmem:[%s0] sm:$0xff]
  %v27 = vld [vmem:[%s0 + $0x10] sm:$0xff]
  %v28 = vld [vmem:[%s1] sm:$0xf]
  %v29 = vld [vmem:[%s1 + $0x8] sm:$0xf]
  %v30 = vunpack.c.l.bf16 %v28
  %v31 = vunpack.c.l.bf16 %v29
  %v32 = vsel %vm24, %v26, 1.0
  %v33 = vsel %vm25, %v27, 1.0
  %v34 = vsel %vm24, %v30, 0.0
  %v35 = vsel %vm25, %v31, 0.0
  %v36 = vadd.f32 %v32, 1e-07
  %v37 = vadd.f32 %v33, 1e-07
  %v38 = vlog2.pop %v36
  %v39 = vmul.f32 %v38, 0.6931472
  %v40 = vlog2.pop %v37
  %v41 = vmul.f32 %v40, 0.6931472
  %v42 = vsub.f32 0.0, %v39
  %v43 = vsub.f32 0.0, %v41
  %v44 = vmul.f32 %v42, %v34
  %v45 = vmul.f32 %v43, %v35
  %v46 = vsub.f32 1.0, %v32
  %v47 = vsub.f32 1.0, %v33
  %v48 = vmul.f32 %v46, %v46
  %v49 = vmul.f32 %v47, %v47
  %v50 = vmul.f32 %v48, %v44
  %v51 = vmul.f32 %v49, %v45
  %v52 = vadd.f32 %v50, 0.0
  %v53 = vadd.f32 %v51, 0.0
  %v54 = vld [vmem:[%s0 + $0x8] sm:$0xff]
  %v55 = vld [vmem:[%s0 + $0x18] sm:$0xff]
  %v56 = vld [vmem:[%s1 + $0x4] sm:$0xf]
  %v57 = vld [vmem:[%s1 + $0xc] sm:$0xf]
  %v58 = vunpack.c.l.bf16 %v56
  %v59 = vunpack.c.l.bf16 %v57
  %v60 = vsel %vm24, %v54, 1.0
  %v61 = vsel %vm25, %v55, 1.0
  %v62 = vsel %vm24, %v58, 0.0
  %v63 = vsel %vm25, %v59, 0.0
  %v64 = vadd.f32 %v60, 1e-07
  %v65 = vadd.f32 %v61, 1e-07
  %v66 = vlog2.pop %v64
  %v67 = vmul.f32 %v66, 0.6931472
  %v68 = vlog2.pop %v65
  %v69 = vmul.f32 %v68, 0.6931472
  %v70 = vsub.f32 0.0, %v67
  %v71 = vsub.f32 0.0, %v69
  %v72 = vmul.f32 %v70, %v62
  %v73 = vmul.f32 %v71, %v63
  %v74 = vsub.f32 1.0, %v60
  %v75 = vsub.f32 1.0, %v61
  %v76 = vmul.f32 %v74, %v74
  %v77 = vmul.f32 %v75, %v75
  %v78 = vmul.f32 %v76, %v72
  %v79 = vmul.f32 %v77, %v73
  %v80 = vadd.f32 %v52, %v78
  %v81 = vadd.f32 %v53, %v79
  %v82 = vld [vmem:[%s2] sm:$0xff]
  %v83 = vld [vmem:[%s2 + $0x8] sm:$0xff]
  %v84 = vadd.f32 %v82, %v80
  %v85 = vadd.f32 %v83, %v81
  %86 = vst [vmem:[%s2] sm:$0xff] %v84
  %87 = vst [vmem:[%s2 + $0x8] sm:$0xff] %v85
  // Predicated region
  $region14: #{focal_loss.1} parent=0 // pred_check
    _
  $region15: #{focal_loss.1} parent=0 // pred_check_branch
    %89 = sbr.rel (0) target = $region17
  $region16: #{focal_loss.1} parent=0 // pred_region
    _
  $region17: #{focal_loss.1} parent=0 // pred_fallthru
    _
  // Predicated region
  $region18: #{focal_loss.1} parent=0 // pred_check
    _
  $region19: #{focal_loss.1} parent=0 // pred_check_branch
    %91 = sbr.rel (0) target = $region21
  $region20: #{focal_loss.1} parent=0 // pred_region
    _
  $region21: #{focal_loss.1} parent=0 // pred_fallthru
    _

</llo_original>
